<compile_context>
chip_gen: v6e
topology: v6e:2x2x1
jax: 0.10.0
libtpu: 0.0.40
codegen_flags: <defaults>
</compile_context>

<pallas_src>
import functools

import jax
import jax.numpy as jnp
from jax.experimental import pallas as pl
from jax.experimental.pallas import tpu as pltpu

F32 = jnp.float32
BF16 = jnp.bfloat16
LN_EPS = 1e-8                       # torch.nn.LayerNorm(eps=1e-08) in the reference
NEG_INF = float(-2.0 ** 32 + 1)     # masking constant used by the reference


# --------------------------------------------------------------------------- #
# helpers
# --------------------------------------------------------------------------- #
def _row_tile(rows, max_tile=512):
    """Largest row tile <= max_tile that divides `rows` and is 8-aligned."""
    if rows <= max_tile:
        return rows
    for t in range(max_tile, 7, -8):
        if t % 8 == 0 and rows % t == 0:
            return t
    return rows


def _col_tile(cols):
    for t in (512, 384, 256, 128):
        if cols % t == 0:
            return t
    return cols


def _q_tile(seq_len, rel_bins):
    """Query tile so the (tq, L, rel_bins->lanes) f32 one-hot stays ~<=8 MiB."""
    lanes = ((max(rel_bins, 1) + 127) // 128) * 128
    cap = max(8, min(128, (8 * 1024 * 1024) // max(1, seq_len * lanes * 4)))
    if seq_len <= cap:
        return seq_len
    for t in range(cap - cap % 8, 7, -8):
        if seq_len % t == 0:
            return t
    return seq_len


def _full_spec(shape, grid_ndim):
    """BlockSpec for an operand broadcast to every grid step (block == array)."""
    zero = (0,) * len(shape)
    if grid_ndim == 1:
        return pl.BlockSpec(shape, lambda i: zero)
    if grid_ndim == 2:
        return pl.BlockSpec(shape, lambda i, j: zero)
    raise ValueError(grid_ndim)


def _layernorm(x, g, b):
    mu = jnp.mean(x, axis=-1, keepdims=True)
    xc = x - mu
    var = jnp.mean(xc * xc, axis=-1, keepdims=True)     # biased, like torch LN
    return xc * jax.lax.rsqrt(var + LN_EPS) * g + b


# --------------------------------------------------------------------------- #
# fused LayerNorm + Q projection + folded (K|V) projection -> 4 dense outputs
# --------------------------------------------------------------------------- #
def _ln_qkv_kernel(x_ref, g_ref, b_ref, wq_ref, bq_ref, wkv_ref, bkv_ref,
                   qln_ref, q_ref, k_ref, v_ref):
    x = x_ref[...]
    xn = _layernorm(x, g_ref[...], b_ref[...])
    qln_ref[...] = xn
    q_ref[...] = (jnp.dot(xn.astype(BF16), wq_ref[...].astype(BF16),
                          preferred_element_type=F32) + bq_ref[...])
    kv = (jnp.dot(x.astype(BF16), wkv_ref[...].astype(BF16),
                  preferred_element_type=F32) + bkv_ref[...])
    H = x.shape[1]
    k_ref[...] = kv[:, :H]
    v_ref[...] = kv[:, H:]


def ln_qkv(x2d, g, b, wq, bq, wkv, bkv):
    R, H = x2d.shape
    tm = _row_tile(R)
    row_h = pl.BlockSpec((tm, H), lambda i: (i, 0))
    return pl.pallas_call(
        _ln_qkv_kernel,
        grid=(R // tm,),
        in_specs=[row_h] + [_full_spec(a.shape, 1) for a in (g, b, wq, bq, wkv, bkv)],
        out_specs=(row_h, row_h, row_h, row_h),
        out_shape=(jax.ShapeDtypeStruct((R, H), F32),) * 4,
        compiler_params=pltpu.CompilerParams(dimension_semantics=("parallel",)),
    )(x2d, g, b, wq, bq, wkv, bkv)


# --------------------------------------------------------------------------- #
# fused residual + LayerNorm + PointWiseFeedForward + timeline mask
# --------------------------------------------------------------------------- #
def _res_ln_ffn_kernel(qln_ref, mha_ref, keep_ref, g_ref, b_ref,
                       w1_ref, b1_ref, w2_ref, b2_ref, o_ref):
    s = qln_ref[...] + mha_ref[...]
    h = _layernorm(s, g_ref[...], b_ref[...])
    f = jnp.maximum(jnp.dot(h.astype(BF16), w1_ref[...].astype(BF16),
                            preferred_element_type=F32) + b1_ref[...], 0.0)
    f = (jnp.dot(f.astype(BF16), w2_ref[...].astype(BF16),
                 preferred_element_type=F32) + b2_ref[...] + h)
    o_ref[...] = f * keep_ref[...]


def res_ln_ffn(qln, mha, keep, g, b, w1, b1, w2, b2):
    R, H = qln.shape
    tm = _row_tile(R)
    row_h = pl.BlockSpec((tm, H), lambda i: (i, 0))
    row_1 = pl.BlockSpec((tm, 1), lambda i: (i, 0))
    return pl.pallas_call(
        _res_ln_ffn_kernel,
        grid=(R // tm,),
        in_specs=[row_h, row_h, row_1]
                 + [_full_spec(a.shape, 1) for a in (g, b, w1, b1, w2, b2)],
        out_specs=row_h,
        out_shape=jax.ShapeDtypeStruct((R, H), F32),
        compiler_params=pltpu.CompilerParams(dimension_semantics=("parallel",)),
    )(qln, mha, keep, g, b, w1, b1, w2, b2)


# --------------------------------------------------------------------------- #
# fused (x + time_emb) -> final LayerNorm -> pos/neg pairwise logits
# --------------------------------------------------------------------------- #
def _add_ln_pair_kernel(x_ref, t_ref, pe_ref, ne_ref, g_ref, b_ref,
                        f_ref, po_ref, no_ref):
    f = _layernorm(x_ref[...] + t_ref[...], g_ref[...], b_ref[...])
    f_ref[...] = f
    po_ref[...] = jnp.sum(f * pe_ref[...], axis=-1, keepdims=True)
    no_ref[...] = jnp.sum(f * ne_ref[...], axis=-1, keepdims=True)


def add_ln_pair(x2d, t2d, pos_e, neg_e, g, b):
    R, H = x2d.shape
    tm = _row_tile(R)
    row_h = pl.BlockSpec((tm, H), lambda i: (i, 0))
    row_1 = pl.BlockSpec((tm, 1), lambda i: (i, 0))
    return pl.pallas_call(
        _add_ln_pair_kernel,
        grid=(R // tm,),
        in_specs=[row_h, row_h, row_h, row_h,
                  _full_spec(g.shape, 1), _full_spec(b.shape, 1)],
        out_specs=(row_h, row_1, row_1),
        out_shape=(jax.ShapeDtypeStruct((R, H), F32),
                   jax.ShapeDtypeStruct((R, 1), F32),
                   jax.ShapeDtypeStruct((R, 1), F32)),
        compiler_params=pltpu.CompilerParams(dimension_semantics=("parallel",)),
    )(x2d, t2d, pos_e, neg_e, g, b)


# --------------------------------------------------------------------------- #
# Time/Distance-aware multi-head attention
#   grid = (batch, query_tile); no (B,L,L) mask input, no (L,L,H) relational
#   tensors; relational K/V terms reconstructed from the tiny (span+1, H)
#   tables via a shared one-hot + VPU multiply-reduce (no M=1 matmuls).
# --------------------------------------------------------------------------- #
def _attn_kernel(q_ref, k_ref, v_ref, pk_ref, pv_ref, rk_ref, rv_ref,
                 ti_ref, di_ref, keep_ref, o_ref, *, heads, dh, t1, scale):
    tq = q_ref.shape[1]
    L = k_ref.shape[1]
    nrel = rk_ref.shape[0]

    q = q_ref[0]
    k = k_ref[0] + pk_ref[...]           # fold absolute-position K into K
    v = v_ref[0] + pv_ref[...]           # fold absolute-position V into V

    # masks rebuilt in-kernel: padded query rows + causal triangle
    q0 = pl.program_id(1) * tq
    row_ids = q0 + jax.lax.broadcasted_iota(jnp.int32, (tq, L), 0)
    col_ids = jax.lax.broadcasted_iota(jnp.int32, (tq, L), 1)
    pad_row = keep_ref[0] < 0.5                                   # (tq, 1)
    masked = jnp.logical_or(pad_row, col_ids > row_ids)           # (tq, L)

    # combined time/distance one-hot, shared by every head and both uses
    ti = ti_ref[0]
    di = di_ref[0]
    riota = jax.lax.broadcasted_iota(jnp.int32, (tq, L, nrel), 2)
    oh = jnp.logical_or(ti[:, :, None] == riota,
                        (di[:, :, None] + t1) == riota).astype(F32)

    dn_qk = (((1,), (1,)), ((), ()))     # (tq,dh) x (*,dh) -> (tq,*)
    dn_av = (((1,), (0,)), ((), ()))     # (tq,*)  x (*,dh) -> (tq,dh)

    outs = []
    for h in range(heads):               # heads is small: static unroll
        sl = slice(h * dh, (h + 1) * dh)
        qh = q[:, sl].astype(BF16)
        kh = k[:, sl].astype(BF16)
        vh = v[:, sl].astype(BF16)
        rkh = rk_ref[:, sl].astype(BF16)
        rvh = rv_ref[:, sl].astype(BF16)

        aw = jax.lax.dot_general(qh, kh, dn_qk, preferred_element_type=F32)
        # relational-K: gather of (Q_h @ [tK|dK]_h^T) through the shared one-hot
        qrel = jax.lax.dot_general(qh, rkh, dn_qk, preferred_element_type=F32)
        aw = aw + jnp.sum(oh * qrel[:, None, :], axis=-1)
        aw = aw * scale
        aw = jnp.where(masked, NEG_INF, aw)

        aw = aw - jnp.max(aw, axis=-1, keepdims=True)
        aw = jnp.exp(aw)
        aw = aw / jnp.sum(aw, axis=-1, keepdims=True)

        out = jax.lax.dot_general(aw.astype(BF16), vh, dn_av,
                                  preferred_element_type=F32)
        # relational-V: bin attention mass per relation id (VPU), one small matmul
        wb = jnp.sum(aw[:, :, None] * oh, axis=1)                 # (tq, nrel)
        out = out + jax.lax.dot_general(wb.astype(BF16), rvh, dn_av,
                                        preferred_element_type=F32)
        outs.append(out)

    # single lane-dense store of the full (tq, H) tile
    o_ref[0] = outs[0] if heads == 1 else jnp.concatenate(outs, axis=-1)


def attention_block(q, k, v, pos_k, pos_v, relK, relV, t_idx, d_idx, keep, heads, t1):
    B, L, H = q.shape
    dh = H // heads
    nrel = relK.shape[0]
    tq = _q_tile(L, nrel)
    kern = functools.partial(_attn_kernel, heads=heads, dh=dh, t1=t1,
                             scale=1.0 / (dh ** 0.5))
    q_spec = pl.BlockSpec((1, tq, H), lambda b, qi: (b, qi, 0))
    kv_spec = pl.BlockSpec((1, L, H), lambda b, qi: (b, 0, 0))
    idx_spec = pl.BlockSpec((1, tq, L), lambda b, qi: (b, qi, 0))
    keep_spec = pl.BlockSpec((1, tq, 1), lambda b, qi: (b, qi, 0))
    return pl.pallas_call(
        kern,
        grid=(B, L // tq),
        in_specs=[q_spec, kv_spec, kv_spec,
                  _full_spec(pos_k.shape, 2), _full_spec(pos_v.shape, 2),
                  _full_spec(relK.shape, 2), _full_spec(relV.shape, 2),
                  idx_spec, idx_spec, keep_spec],
        out_specs=q_spec,
        out_shape=jax.ShapeDtypeStruct((B, L, H), F32),
        compiler_params=pltpu.CompilerParams(
            dimension_semantics=("parallel", "parallel"),
            vmem_limit_bytes=32 * 1024 * 1024),
    )(q, k, v, pos_k, pos_v, relK, relV, t_idx, d_idx, keep)


# --------------------------------------------------------------------------- #
# fused projection scores + adaptive (softmax-of-exp) fusion of the three views
# --------------------------------------------------------------------------- #
def _proj_fuse_kernel(e_ref, et_ref, ed_ref, w1_ref, b1_ref, w2_ref, b2_ref, o_ref):
    w1 = w1_ref[...].astype(BF16)
    w2 = w2_ref[...].astype(BF16)
    b1, b2 = b1_ref[...], b2_ref[...]

    def score(x):
        h = jnp.dot(x.astype(BF16), w1, preferred_element_type=F32) + b1
        return jnp.dot(h.astype(BF16), w2, preferred_element_type=F32) + b2

    e, et, ed = e_ref[...], et_ref[...], ed_ref[...]
    # softmax(exp([s1,s2,s3]), -1)  (same semantics as the reference, incl. overflow)
    x1, x2, x3 = jnp.exp(score(e)), jnp.exp(score(et)), jnp.exp(score(ed))
    m = jnp.maximum(jnp.maximum(x1, x2), x3)
    a1, a2, a3 = jnp.exp(x1 - m), jnp.exp(x2 - m), jnp.exp(x3 - m)
    denom = a1 + a2 + a3
    o_ref[...] = (a1 * e + a2 * et + a3 * ed) / denom


def project_and_fuse(e, et, ed, w1, b1, w2, b2):
    Ni, H = e.shape
    tm = _row_tile(Ni)
    row_h = pl.BlockSpec((tm, H), lambda i: (i, 0))
    return pl.pallas_call(
        _proj_fuse_kernel,
        grid=(Ni // tm,),
        in_specs=[row_h, row_h, row_h]
                 + [_full_spec(a.shape, 1) for a in (w1, b1, w2, b2)],
        out_specs=row_h,
        out_shape=jax.ShapeDtypeStruct((Ni, H), F32),
        compiler_params=pltpu.CompilerParams(dimension_semantics=("parallel",)),
    )(e, et, ed, w1, b1, w2, b2)


# --------------------------------------------------------------------------- #
# final item logits: bf16 x @ item_fused^T + bf16 spatial bias, f32 accumulate.
# Item-table axis is the OUTER grid axis so each weight tile is fetched once.
# --------------------------------------------------------------------------- #
def _logits_kernel(x_ref, w_ref, bias_ref, o_ref):
    o_ref[...] = (jax.lax.dot_general(x_ref[...], w_ref[...],
                                      (((1,), (1,)), ((), ())),
                                      preferred_element_type=F32)
                  + bias_ref[...].astype(F32))


def item_logits(x16, w16_pad, bias16_pad, n_items):
    R, H = x16.shape
    n_pad = w16_pad.shape[0]
    tm = _row_tile(R)
    tn = _col_tile(n_pad)
    out = pl.pallas_call(
        _logits_kernel,
        grid=(n_pad // tn, R // tm),          # weight axis outer, rows inner
        in_specs=[pl.BlockSpec((tm, H), lambda j, i: (i, 0)),
                  pl.BlockSpec((tn, H), lambda j, i: (j, 0)),
                  pl.BlockSpec((tm, tn), lambda j, i: (i, j))],
        out_specs=pl.BlockSpec((tm, tn), lambda j, i: (i, j)),
        out_shape=jax.ShapeDtypeStruct((R, n_pad), F32),
        compiler_params=pltpu.CompilerParams(
            dimension_semantics=("parallel", "parallel")),
    )(x16, w16_pad, bias16_pad)
    return out[:, :n_items]


# --------------------------------------------------------------------------- #
# model glue (layout plumbing in plain JAX, compute in the kernels above)
# --------------------------------------------------------------------------- #
def seq2feats_blocks(p, log_seqs, time_matrices, dis_matrices, item_embs, heads):
    B, L = log_seqs.shape
    H = item_embs.shape[1]
    R = B * L

    seqs = item_embs[log_seqs]                       # (B,L,H) XLA gather
    pos_k = p["abs_pos_K"][:L]                       # (L,H)
    pos_v = p["abs_pos_V"][:L]

    keep3 = (log_seqs != 0).astype(F32)[:, :, None]  # (B,L,1)  1.0 = real token
    keep2 = keep3.reshape(R, 1)
    seqs = seqs * keep3

    t1 = p["tmat_K"].shape[0]
    relK = jnp.concatenate([p["tmat_K"], p["dmat_K"]], axis=0)    # (T1+D1, H)
    relV = jnp.concatenate([p["tmat_V"], p["dmat_V"]], axis=0)
    t_idx = time_matrices.astype(jnp.int32)
    d_idx = dis_matrices.astype(jnp.int32)

    for blk in p["blocks"]:
        x2 = seqs.reshape(R, H)
        q_ln, q, k, v = ln_qkv(x2, blk["attn_ln_g"], blk["attn_ln_b"],
                               blk["Wq"], blk["bq"], blk["Wkv"], blk["bkv"])
        mha = attention_block(q.reshape(B, L, H), k.reshape(B, L, H),
                              v.reshape(B, L, H), pos_k, pos_v, relK, relV,
                              t_idx, d_idx, keep3, heads, t1)
        seqs = res_ln_ffn(q_ln, mha.reshape(R, H), keep2,
                          blk["fwd_ln_g"], blk["fwd_ln_b"],
                          blk["W1"], blk["b1"], blk["W2"], blk["b2"]).reshape(B, L, H)
    return seqs


def _triplet(anchor, positive, negative, margin=1.0, eps=1e-6):
    # torch.nn.TripletMarginLoss semantics (F.pairwise_distance adds eps to diff)
    dp = jnp.linalg.norm(anchor - positive + eps, axis=-1)
    dn = jnp.linalg.norm(anchor - negative + eps, axis=-1)
    return jnp.mean(jnp.maximum(dp - dn + margin, 0.0))


def magcn_forward(p, log_seqs, time_seqs_nxt, time_matrices, dis_matrices,
                  pos_seqs, neg_seqs, class_tra, class_tem, class_dis,
                  spatial_bias, heads, contra_intra=0.1, contra_inter=0.1):
    # TODO(synk): AGCN_anchor (self.gcn) not in the reference source -> stand-in outputs.
    item_embs = p["item_emb"]
    item_embs_tem = p["item_emb_tem"]
    item_embs_dis = p["item_emb_dis"]
    support = jnp.zeros_like(spatial_bias)
    support_tem = jnp.zeros_like(spatial_bias)
    support_dis = jnp.zeros_like(spatial_bias)

    pos_tra, neg_tra, anc_tra = class_tra[:, 0], class_tra[:, 1], class_tra[:, 2]
    pos_tem, neg_tem, anc_tem = class_tem[:, 0], class_tem[:, 1], class_tem[:, 2]
    pos_dis, neg_dis, anc_dis = class_dis[:, 0], class_dis[:, 1], class_dis[:, 2]
    contra_loss_intra = (_triplet(pos_tra, neg_tra, anc_tra)
                         + _triplet(pos_tem, neg_tem, anc_tem)
                         + _triplet(pos_dis, neg_dis, anc_dis))
    contra_loss_inter = (_triplet(pos_tem, neg_tra, anc_tra) + _triplet(pos_dis, neg_tra, anc_tra)
                         + _triplet(pos_tra, neg_tem, anc_tem) + _triplet(pos_dis, neg_tem, anc_tem)
                         + _triplet(pos_tra, neg_dis, anc_dis) + _triplet(pos_tem, neg_dis, anc_dis))
    contra_loss = contra_intra * contra_loss_intra + contra_inter * contra_loss_inter

    item_fused = project_and_fuse(item_embs, item_embs_tem, item_embs_dis,
                                  p["proj_W1"], p["proj_b1"], p["proj_W2"], p["proj_b2"])

    seqs = seq2feats_blocks(p, log_seqs, time_matrices, dis_matrices, item_fused, heads)

    B, L = log_seqs.shape
    H = item_fused.shape[1]
    R = B * L
    temb = p["time_emb"][time_seqs_nxt].reshape(R, H)
    pos_embs = item_fused[pos_seqs].reshape(R, H)
    neg_embs = item_fused[neg_seqs].reshape(R, H)
    log_feats2d, pos_l, neg_l = add_ln_pair(seqs.reshape(R, H), temb, pos_embs, neg_embs,
                                            p["last_ln_g"], p["last_ln_b"])
    pos_logits = pos_l.reshape(B, L)
    neg_logits = neg_l.reshape(B, L)

    Ni = item_fused.shape[0]
    n_pad = ((Ni + 127) // 128) * 128
    itf16 = jnp.pad(item_fused.astype(BF16), ((0, n_pad - Ni), (0, 0)))
    # TODO(synk): replace with an in-kernel scalar-prefetch DMA gather of
    #             spatial_bias rows; for now the XLA gather streams bf16 only.
    sb16 = jnp.pad(spatial_bias.astype(BF16), ((0, 0), (0, n_pad - Ni)))
    bias16 = sb16[log_seqs.reshape(-1)]                           # (B*L, n_pad) bf16
    fin_logits = item_logits(log_feats2d.astype(BF16), itf16, bias16, Ni)
    return pos_logits, neg_logits, fin_logits, support, support_tem, support_dis, contra_loss


# --------------------------------------------------------------------------- #
# deterministic parameter init
# --------------------------------------------------------------------------- #
def init_params(key, H, num_blocks, n_items, time_slot, time_span, dis_span, maxlen):
    keys = iter(jax.random.split(key, 64))
    nrm = lambda shape, s=0.05: jax.random.normal(next(keys), shape, F32) * s
    p = {}
    p["item_emb"] = nrm((n_items, H)).at[0].set(0.0)       # padding_idx=0
    p["item_emb_tem"] = nrm((n_items, H)).at[0].set(0.0)   # stand-in for gcn output
    p["item_emb_dis"] = nrm((n_items, H)).at[0].set(0.0)   # stand-in for gcn output
    p["time_emb"] = nrm((time_slot + 1, H)).at[0].set(0.0)
    p["abs_pos_K"] = nrm((maxlen, H))
    p["abs_pos_V"] = nrm((maxlen, H))
    p["tmat_K"] = nrm((time_span + 1, H))
    p["tmat_V"] = nrm((time_span + 1, H))
    p["dmat_K"] = nrm((dis_span + 1, H))
    p["dmat_V"] = nrm((dis_span + 1, H))
    p["proj_W1"] = nrm((H, H))
    p["proj_b1"] = jnp.zeros((1, H), F32)
    p["proj_W2"] = nrm((H, 1))
    p["proj_b2"] = jnp.zeros((1, 1), F32)
    p["last_ln_g"] = jnp.ones((1, H), F32)
    p["last_ln_b"] = jnp.zeros((1, H), F32)
    blocks = []
    for _ in range(num_blocks):
        blocks.append(dict(
            attn_ln_g=jnp.ones((1, H), F32), attn_ln_b=jnp.zeros((1, H), F32),
            Wq=nrm((H, H)), bq=jnp.zeros((1, H), F32),
            Wkv=nrm((H, 2 * H)), bkv=jnp.zeros((1, 2 * H), F32),
            fwd_ln_g=jnp.ones((1, H), F32), fwd_ln_b=jnp.zeros((1, H), F32),
            W1=nrm((H, H)), b1=jnp.zeros((1, H), F32),
            W2=nrm((H, H)), b2=jnp.zeros((1, H), F32),
        ))
    p["blocks"] = blocks
    return p


# --------------------------------------------------------------------------- #
if __name__ == "__main__":
    B, L, H = 2, 8, 32
    heads, num_blocks = 2, 2
    item_num, time_slot, time_span, dis_span = 20, 10, 12, 12
    n_items = item_num + 1
    n_anchor = 4

    key = jax.random.PRNGKey(0)
    kp, k1, k2, k3, k4, k5, k6, k7, k8, k9, k10 = jax.random.split(key, 11)

    params = init_params(kp, H, num_blocks, n_items, time_slot, time_span, dis_span, L)

    log_seqs = jax.random.randint(k1, (B, L), 0, n_items)
    time_seqs_nxt = jax.random.randint(k2, (B, L), 0, time_slot + 1)
    time_matrices = jax.random.randint(k3, (B, L, L), 0, time_span + 1)
    dis_matrices = jax.random.randint(k4, (B, L, L), 0, dis_span + 1)
    pos_seqs = jax.random.randint(k5, (B, L), 1, n_items)
    neg_seqs = jax.random.randint(k6, (B, L), 1, n_items)
    spatial_bias = jax.random.normal(k7, (n_items, n_items), F32) * 0.1
    class_tra = jax.random.normal(k8, (n_anchor, 3, H), F32)
    class_tem = jax.random.normal(k9, (n_anchor, 3, H), F32)
    class_dis = jax.random.normal(k10, (n_anchor, 3, H), F32)

    outs = magcn_forward(params, log_seqs, time_seqs_nxt, time_matrices, dis_matrices,
                         pos_seqs, neg_seqs, class_tra, class_tem, class_dis,
                         spatial_bias, heads)
    pos_logits, neg_logits, fin_logits, support, support_tem, support_dis, contra_loss = outs
    jax.block_until_ready((pos_logits, neg_logits, fin_logits, contra_loss))

    assert pos_logits.shape == (B, L)
    assert neg_logits.shape == (B, L)
    assert fin_logits.shape == (B * L, n_items)
    print("KERNEL_OK")
</pallas_src>

<mosaic_0001>
module attributes {stable_mosaic.version = 11 : i64} {
  func.func @_proj_fuse_kernel(%arg0: i32, %arg1: memref<21x32xf32, #tpu.memory_space<vmem>>, %arg2: memref<21x32xf32, #tpu.memory_space<vmem>>, %arg3: memref<21x32xf32, #tpu.memory_space<vmem>>, %arg4: memref<32x32xf32, #tpu.memory_space<vmem>>, %arg5: memref<1x32xf32, #tpu.memory_space<vmem>>, %arg6: memref<32x1xf32, #tpu.memory_space<vmem>>, %arg7: memref<1x1xf32, #tpu.memory_space<vmem>>, %arg8: memref<21x32xf32, #tpu.memory_space<vmem>>) attributes {dimension_semantics = [#tpu.dimension_semantics<parallel>], iteration_bounds = array<i64: 1>, scalar_prefetch = 0 : i64, scratch_operands = 0 : i64, tpu.core_type = #tpu.core_type<tc>, window_params = [{transform_indices = @transform_0, window_bounds = array<i64: 21, 32>}, {transform_indices = @transform_1, window_bounds = array<i64: 21, 32>}, {transform_indices = @transform_2, window_bounds = array<i64: 21, 32>}, {pipeline_mode = #tpu.pipeline_mode<synchronous>, transform_indices = @transform_3, window_bounds = array<i64: 32, 32>}, {pipeline_mode = #tpu.pipeline_mode<synchronous>, transform_indices = @transform_4, window_bounds = array<i64: 1, 32>}, {pipeline_mode = #tpu.pipeline_mode<synchronous>, transform_indices = @transform_5, window_bounds = array<i64: 32, 1>}, {pipeline_mode = #tpu.pipeline_mode<synchronous>, transform_indices = @transform_6, window_bounds = array<i64: 1, 1>}, {transform_indices = @transform_7, window_bounds = array<i64: 21, 32>}]} {
    %c0 = arith.constant 0 : index
    %c0_0 = arith.constant 0 : index
    %0 = vector.load %arg4[%c0, %c0_0] : memref<32x32xf32, #tpu.memory_space<vmem>>, vector<32x32xf32>
    %1 = arith.truncf %0 : vector<32x32xf32> to vector<32x32xbf16>
    %c0_1 = arith.constant 0 : index
    %c0_2 = arith.constant 0 : index
    %2 = vector.load %arg6[%c0_1, %c0_2] : memref<32x1xf32, #tpu.memory_space<vmem>>, vector<32x1xf32>
    %3 = arith.truncf %2 : vector<32x1xf32> to vector<32x1xbf16>
    %c0_3 = arith.constant 0 : index
    %c0_4 = arith.constant 0 : index
    %4 = vector.load %arg5[%c0_3, %c0_4] : memref<1x32xf32, #tpu.memory_space<vmem>>, vector<1x32xf32>
    %c0_5 = arith.constant 0 : index
    %c0_6 = arith.constant 0 : index
    %5 = vector.load %arg7[%c0_5, %c0_6] : memref<1x1xf32, #tpu.memory_space<vmem>>, vector<1x1xf32>
    %c0_7 = arith.constant 0 : index
    %c0_8 = arith.constant 0 : index
    %6 = vector.load %arg1[%c0_7, %c0_8] : memref<21x32xf32, #tpu.memory_space<vmem>>, vector<21x32xf32>
    %c0_9 = arith.constant 0 : index
    %c0_10 = arith.constant 0 : index
    %7 = vector.load %arg2[%c0_9, %c0_10] : memref<21x32xf32, #tpu.memory_space<vmem>>, vector<21x32xf32>
    %c0_11 = arith.constant 0 : index
    %c0_12 = arith.constant 0 : index
    %8 = vector.load %arg3[%c0_11, %c0_12] : memref<21x32xf32, #tpu.memory_space<vmem>>, vector<21x32xf32>
    %9 = arith.truncf %6 : vector<21x32xf32> to vector<21x32xbf16>
    %cst = arith.constant dense<0.000000e+00> : vector<21x32xf32>
    %10 = tpu.matmul %9, %1, %cst {dimension_numbers = #tpu.dot_dimension_numbers<[1], [0], [0], [1], [0, 0, 1, 1], [], []>} : vector<21x32xbf16>, vector<32x32xbf16>, vector<21x32xf32> -> vector<21x32xf32>
    %11 = vector.broadcast %4 : vector<1x32xf32> to vector<21x32xf32>
    %12 = arith.addf %10, %11 : vector<21x32xf32>
    %13 = arith.truncf %12 : vector<21x32xf32> to vector<21x32xbf16>
    %cst_13 = arith.constant dense<0.000000e+00> : vector<21x1xf32>
    %14 = tpu.matmul %13, %3, %cst_13 {dimension_numbers = #tpu.dot_dimension_numbers<[1], [0], [0], [1], [0, 0, 1, 1], [], []>} : vector<21x32xbf16>, vector<32x1xbf16>, vector<21x1xf32> -> vector<21x1xf32>
    %15 = vector.broadcast %5 : vector<1x1xf32> to vector<21x1xf32>
    %16 = arith.addf %14, %15 : vector<21x1xf32>
    %17 = math.exp %16 : vector<21x1xf32>
    %18 = arith.truncf %7 : vector<21x32xf32> to vector<21x32xbf16>
    %cst_14 = arith.constant dense<0.000000e+00> : vector<21x32xf32>
    %19 = tpu.matmul %18, %1, %cst_14 {dimension_numbers = #tpu.dot_dimension_numbers<[1], [0], [0], [1], [0, 0, 1, 1], [], []>} : vector<21x32xbf16>, vector<32x32xbf16>, vector<21x32xf32> -> vector<21x32xf32>
    %20 = vector.broadcast %4 : vector<1x32xf32> to vector<21x32xf32>
    %21 = arith.addf %19, %20 : vector<21x32xf32>
    %22 = arith.truncf %21 : vector<21x32xf32> to vector<21x32xbf16>
    %cst_15 = arith.constant dense<0.000000e+00> : vector<21x1xf32>
    %23 = tpu.matmul %22, %3, %cst_15 {dimension_numbers = #tpu.dot_dimension_numbers<[1], [0], [0], [1], [0, 0, 1, 1], [], []>} : vector<21x32xbf16>, vector<32x1xbf16>, vector<21x1xf32> -> vector<21x1xf32>
    %24 = vector.broadcast %5 : vector<1x1xf32> to vector<21x1xf32>
    %25 = arith.addf %23, %24 : vector<21x1xf32>
    %26 = math.exp %25 : vector<21x1xf32>
    %27 = arith.truncf %8 : vector<21x32xf32> to vector<21x32xbf16>
    %cst_16 = arith.constant dense<0.000000e+00> : vector<21x32xf32>
    %28 = tpu.matmul %27, %1, %cst_16 {dimension_numbers = #tpu.dot_dimension_numbers<[1], [0], [0], [1], [0, 0, 1, 1], [], []>} : vector<21x32xbf16>, vector<32x32xbf16>, vector<21x32xf32> -> vector<21x32xf32>
    %29 = vector.broadcast %4 : vector<1x32xf32> to vector<21x32xf32>
    %30 = arith.addf %28, %29 : vector<21x32xf32>
    %31 = arith.truncf %30 : vector<21x32xf32> to vector<21x32xbf16>
    %cst_17 = arith.constant dense<0.000000e+00> : vector<21x1xf32>
    %32 = tpu.matmul %31, %3, %cst_17 {dimension_numbers = #tpu.dot_dimension_numbers<[1], [0], [0], [1], [0, 0, 1, 1], [], []>} : vector<21x32xbf16>, vector<32x1xbf16>, vector<21x1xf32> -> vector<21x1xf32>
    %33 = vector.broadcast %5 : vector<1x1xf32> to vector<21x1xf32>
    %34 = arith.addf %32, %33 : vector<21x1xf32>
    %35 = math.exp %34 : vector<21x1xf32>
    %36 = arith.maximumf %17, %26 : vector<21x1xf32>
    %37 = arith.maximumf %36, %35 : vector<21x1xf32>
    %38 = arith.subf %17, %37 : vector<21x1xf32>
    %39 = math.exp %38 : vector<21x1xf32>
    %40 = arith.subf %26, %37 : vector<21x1xf32>
    %41 = math.exp %40 : vector<21x1xf32>
    %42 = arith.subf %35, %37 : vector<21x1xf32>
    %43 = math.exp %42 : vector<21x1xf32>
    %44 = arith.addf %39, %41 : vector<21x1xf32>
    %45 = arith.addf %44, %43 : vector<21x1xf32>
    %46 = vector.broadcast %39 : vector<21x1xf32> to vector<21x32xf32>
    %47 = arith.mulf %46, %6 : vector<21x32xf32>
    %48 = vector.broadcast %41 : vector<21x1xf32> to vector<21x32xf32>
    %49 = arith.mulf %48, %7 : vector<21x32xf32>
    %50 = arith.addf %47, %49 : vector<21x32xf32>
    %51 = vector.broadcast %43 : vector<21x1xf32> to vector<21x32xf32>
    %52 = arith.mulf %51, %8 : vector<21x32xf32>
    %53 = arith.addf %50, %52 : vector<21x32xf32>
    %54 = vector.broadcast %45 : vector<21x1xf32> to vector<21x32xf32>
    %55 = arith.divf %53, %54 : vector<21x32xf32>
    %c0_18 = arith.constant 0 : index
    %c0_19 = arith.constant 0 : index
    %56 = vector.load %arg8[%c0_18, %c0_19] : memref<21x32xf32, #tpu.memory_space<vmem>>, vector<21x32xf32>
    tpu.vector_store %arg8[%c0_18, %c0_19], %55 {strides = array<i32>} : memref<21x32xf32, #tpu.memory_space<vmem>>, vector<21x32xf32>,
    return
  }
  func.func @transform_0(%arg0: i32) -> (i32, i32) {
    %c0_i32 = arith.constant 0 : i32
    %c0_i32_0 = arith.constant 0 : i32
    return %arg0, %c0_i32 : i32, i32
  }
  func.func @transform_1(%arg0: i32) -> (i32, i32) {
    %c0_i32 = arith.constant 0 : i32
    %c0_i32_0 = arith.constant 0 : i32
    return %arg0, %c0_i32 : i32, i32
  }
  func.func @transform_2(%arg0: i32) -> (i32, i32) {
    %c0_i32 = arith.constant 0 : i32
    %c0_i32_0 = arith.constant 0 : i32
    return %arg0, %c0_i32 : i32, i32
  }
  func.func @transform_3(%arg0: i32) -> (i32, i32) {
    %c0_i32 = arith.constant 0 : i32
    %c0_i32_0 = arith.constant 0 : i32
    %c0_i32_1 = arith.constant 0 : i32
    return %c0_i32, %c0_i32_0 : i32, i32
  }
  func.func @transform_4(%arg0: i32) -> (i32, i32) {
    %c0_i32 = arith.constant 0 : i32
    %c0_i32_0 = arith.constant 0 : i32
    %c0_i32_1 = arith.constant 0 : i32
    return %c0_i32, %c0_i32_0 : i32, i32
  }
  func.func @transform_5(%arg0: i32) -> (i32, i32) {
    %c0_i32 = arith.constant 0 : i32
    %c0_i32_0 = arith.constant 0 : i32
    %c0_i32_1 = arith.constant 0 : i32
    return %c0_i32, %c0_i32_0 : i32, i32
  }
  func.func @transform_6(%arg0: i32) -> (i32, i32) {
    %c0_i32 = arith.constant 0 : i32
    %c0_i32_0 = arith.constant 0 : i32
    %c0_i32_1 = arith.constant 0 : i32
    return %c0_i32, %c0_i32_0 : i32, i32
  }
  func.func @transform_7(%arg0: i32) -> (i32, i32) {
    %c0_i32 = arith.constant 0 : i32
    %c0_i32_0 = arith.constant 0 : i32
    return %arg0, %c0_i32 : i32, i32
  }
}

</mosaic_0001>

<llo_original>
// kernel: tpu_custom_call.1
$region0: #{tpu_custom_call.1}
  #allocation0 [shape = 'u32[]', space=smem, size = 0x4, offset = 0x4, fixed_abs, tag = 'smem constant byte address 0x4 - core index']
  #allocation1 [shape = 'u32[144,128]{1,0:T(1,128)}', space=vmem, size = 0x12000, scoped, tag = 'internal scratch']
  #allocation2 [shape = 'f32[1,1]{1,0:T(1,128)S(1)}', space=vmem, size = 0x200, scoped, tag = 'scoped memory for tpu_custom_call.1']
  %s0 = inlined_call_operand.hbm [shape: f32[21,32], index: 0, kind: input, shape index: {}]
  %s1 = inlined_call_operand.hbm [shape: f32[21,32], index: 1, kind: input, shape index: {}]
  %s2 = inlined_call_operand.hbm [shape: f32[21,32], index: 2, kind: input, shape index: {}]
  %s3 = inlined_call_operand.vmem [shape: f32[32,32], index: 3, kind: input, shape index: {}]
  %s4 = inlined_call_operand.vmem [shape: f32[1,32], index: 4, kind: input, shape index: {}]
  %s5 = inlined_call_operand.vmem [shape: f32[32,1], index: 5, kind: input, shape index: {}]
  %s6 = inlined_call_operand.<no memory space> [shape: f32[1,1], index: 6, kind: input, shape index: {}]
  %s7 = inlined_call_operand.hbm [shape: f32[21,32], index: 7, kind: output, shape index: {}]
  %s8 = sld [smem:[#allocation0]]
  $region50: #{tpu_custom_call.1} parent=0
    _
  %s10 = ssub.s32 1, %s8
  %s11 = scalar_select 0, %s10, %s8
  %v12 = vstv %s6
  %13 = vst [vmem:[#allocation2] sm:$0x1] %v12
  $region1: #{tpu_custom_call.1} parent=0
    #allocation3 [shape = 'u8[12288]{0}', space=vmem, size = 0x3000, scoped, tag = 'input window, operand 0, single buffered']
    #allocation4 [shape = 's32[1]{0}', space=sflag, size = 0x4, scoped, tag = 'scoped memory for tpu_custom_call.1']
    #allocation5 [shape = 's32[1]{0}', space=sflag, size = 0x4, scoped, tag = 'scoped memory for tpu_custom_call.1']
    #allocation6 [shape = 'u8[12288]{0}', space=vmem, size = 0x3000, scoped, tag = 'input window, operand 1, single buffered']
    #allocation7 [shape = 's32[1]{0}', space=sflag, size = 0x4, scoped, tag = 'scoped memory for tpu_custom_call.1']
    #allocation8 [shape = 'u8[12288]{0}', space=vmem, size = 0x3000, scoped, tag = 'input window, operand 2, single buffered']
    #allocation9 [shape = 'u8[12288]{0}', space=vmem, size = 0x3000, scoped, tag = 'output window, operand 0, single buffered']
    %14 = vsyncpa [#allocation4], 0
    %15 = vsyncpa [#allocation7], 0
    %16 = vsyncpa [#allocation5], 0
    // Predicated region
    $region2: #{tpu_custom_call.1} parent=1 // pred_check
      _
    $region3: #{tpu_custom_call.1} parent=1 // pred_check_branch
      %18 = sbr.rel (0) target = $region5
    $region4: #{tpu_custom_call.1} parent=1 // pred_region
      %s20 = ssub.s32 384, 384
      %21 = vsyncadd [#allocation4], %s20
      %s22 = sshll.u32 [#allocation3], 4
      %s23 = int_to_ptr.vmem [resolvable:$true] %s22
      %28 = dma.hbm_to_vmem [thread:$0]  %s0, 384, %s23, [#allocation4], 128, 128, 8
    $region5: #{tpu_custom_call.1} parent=1 // pred_fallthru
      _
    // Predicated region
    $region6: #{tpu_custom_call.1} parent=1 // pred_check
      _
    $region7: #{tpu_custom_call.1} parent=1 // pred_check_branch
      %30 = sbr.rel (0) target = $region9
    $region8: #{tpu_custom_call.1} parent=1 // pred_region
      %s32 = ssub.s32 384, 384
      %33 = vsyncadd [#allocation7], %s32
      %s34 = sshll.u32 [#allocation6], 4
      %s35 = int_to_ptr.vmem [resolvable:$true] %s34
      %40 = dma.hbm_to_vmem [thread:$0]  %s1, 384, %s35, [#allocation7], 128, 128, 8
    $region9: #{tpu_custom_call.1} parent=1 // pred_fallthru
      _
    // Predicated region
    $region10: #{tpu_custom_call.1} parent=1 // pred_check
      _
    $region11: #{tpu_custom_call.1} parent=1 // pred_check_branch
      %42 = sbr.rel (0) target = $region13
    $region12: #{tpu_custom_call.1} parent=1 // pred_region
      %s44 = ssub.s32 384, 384
      %45 = vsyncadd [#allocation7], %s44
      %s46 = sshll.u32 [#allocation8], 4
      %s47 = int_to_ptr.vmem [resolvable:$true] %s46
      %52 = dma.hbm_to_vmem [thread:$0]  %s2, 384, %s47, [#allocation7], 128, 128, 8
    $region13: #{tpu_custom_call.1} parent=1 // pred_fallthru
      _
    // Predicated region
    $region14: #{tpu_custom_call.1} parent=1 // pred_check
      _
    $region15: #{tpu_custom_call.1} parent=1 // pred_check_branch
      %54 = sbr.rel (0) target = $region17
    $region16: #{tpu_custom_call.1} parent=1 // pred_region
      _
    $region17: #{tpu_custom_call.1} parent=1 // pred_fallthru
      _
    // Predicated region
    $region18: #{tpu_custom_call.1} parent=1 // pred_check
      _
    $region19: #{tpu_custom_call.1} parent=1 // pred_check_branch
      %56 = sbr.rel (0) target = $region21
    $region20: #{tpu_custom_call.1} parent=1 // pred_region
      _
    $region21: #{tpu_custom_call.1} parent=1 // pred_fallthru
      _
    // Predicated region
    $region22: #{tpu_custom_call.1} parent=1 // pred_check
      _
    $region23: #{tpu_custom_call.1} parent=1 // pred_check_branch
      %58 = sbr.rel (0) target = $region25
    $region24: #{tpu_custom_call.1} parent=1 // pred_region
      _
    $region25: #{tpu_custom_call.1} parent=1 // pred_fallthru
      _
    // Predicated region
    $region26: #{tpu_custom_call.1} parent=1 // pred_check
      _
    $region27: #{tpu_custom_call.1} parent=1 // pred_check_branch
      %60 = sbr.rel (0) target = $region29
    $region28: #{tpu_custom_call.1} parent=1 // pred_region
      _
    $region29: #{tpu_custom_call.1} parent=1 // pred_fallthru
      _
    // Predicated region
    $region30: #{tpu_custom_call.1} parent=1 // pred_check
      _
    $region31: #{tpu_custom_call.1} parent=1 // pred_check_branch
      %62 = sbr.rel (0) target = $region33
    $region32: #{tpu_custom_call.1} parent=1 // pred_region
      %63 = dma.done [#allocation4], 384
    $region33: #{tpu_custom_call.1} parent=1 // pred_fallthru
      _
    // Predicated region
    $region34: #{tpu_custom_call.1} parent=1 // pred_check
      _
    $region35: #{tpu_custom_call.1} parent=1 // pred_check_branch
      %65 = sbr.rel (0) target = $region37
    $region36: #{tpu_custom_call.1} parent=1 // pred_region
      %66 = dma.done [#allocation7], 384
    $region37: #{tpu_custom_call.1} parent=1 // pred_fallthru
      _
    // Predicated region
    $region38: #{tpu_custom_call.1} parent=1 // pred_check
      _
    $region39: #{tpu_custom_call.1} parent=1 // pred_check_branch
      %68 = sbr.rel (0) target = $region41
    $region40: #{tpu_custom_call.1} parent=1 // pred_region
      %69 = dma.done [#allocation7], 384
    $region41: #{tpu_custom_call.1} parent=1 // pred_fallthru
      _
    %v71 = vld [vmem:[%s3] sm:$0xff]
    %v72 = vld [vmem:[%s3 + $0x8] sm:$0xff]
    %v73 = vld [vmem:[%s3 + $0x10] sm:$0xff]
    %v74 = vld [vmem:[%s3 + $0x18] sm:$0xff]
    %v75 = vpack.c.bf16 %v72, %v71
    %v76 = vpack.c.bf16 %v74, %v73
    %v77 = vld [vmem:[%s5] sm:$0xff]
    %v78 = vld [vmem:[%s5 + $0x8] sm:$0xff]
    %v79 = vld [vmem:[%s5 + $0x10] sm:$0xff]
    %v80 = vld [vmem:[%s5 + $0x18] sm:$0xff]
    %v81 = vpack.c.bf16 %v78, %v77
    %v82 = vpack.c.bf16 %v80, %v79
    %v83 = vld [vmem:[%s4] sm:$0x1]
    %v84 = vld [vmem:[#allocation2] sm:$0x1]
    %v85 = vld [vmem:[#allocation3] sm:$0xff]
    %v86 = vld [vmem:[#allocation3 + $0x8] sm:$0xff]
    %v87 = vld [vmem:[#allocation3 + $0x10] sm:$0x1f]
    %v88 = vld [vmem:[#allocation6] sm:$0xff]
    %v89 = vld [vmem:[#allocation6 + $0x8] sm:$0xff]
    %v90 = vld [vmem:[#allocation6 + $0x10] sm:$0x1f]
    %v91 = vld [vmem:[#allocation8] sm:$0xff]
    %v92 = vld [vmem:[#allocation8 + $0x8] sm:$0xff]
    %v93 = vld [vmem:[#allocation8 + $0x10] sm:$0x1f]
    %v94 = vpack.c.bf16 %v86, %v85
    %v95 = vpack.c.bf16 %v87, %v87
    %v97 = vlaneseq
    %v98 = vshrl.u32 %v97, 7
    %v99 = vsub.s32 0, %v98
    %v100 = vrot.slane %v83, %v99
    %vm102 = vcmask 261120
    %v104 = vsel %vm102, %v94, 0
    %v107 = vsel %vm102, %v95, 0
    %109 = vmatprep.subr.bf16.mxu0 0
    %110 = vmatpush1.bf16.msra.mxu0 0
    %111 = vmatprep.subr.bf16.mxu0 0
    %112 = vmatpush1.bf16.msra.mxu0 0
    %113 = vmatprep.subr.bf16.mxu0 0
    %114 = vmatpush1.bf16.msra.mxu0 0
    %115 = vmatprep.subr.bf16.mxu0 0
    %116 = vmatpush1.bf16.msra.mxu0 0
    %117 = vmatprep.subr.bf16.mxu0 0
    %118 = vmatpush1.bf16.msra.mxu0 0
    %119 = vmatprep.subr.bf16.mxu0 0
    %120 = vmatpush1.bf16.msra.mxu0 0
    %121 = vmatprep.subr.bf16.mxu0 0
    %122 = vmatpush1.bf16.msra.mxu0 %v76
    %123 = vmatprep.subr.bf16.mxu0 0
    %124 = vmatpush1.bf16.msra.mxu0 %v75
    %125 = vmatprep.subr.bf16.mxu0 0
    %126 = vmatpush2.bf16.msra.mxu0 0
    %127 = vmatprep.subr.bf16.mxu0 0
    %128 = vmatpush2.bf16.msra.mxu0 0
    %129 = vmatprep.subr.bf16.mxu0 0
    %130 = vmatpush2.bf16.msra.mxu0 0
    %131 = vmatprep.subr.bf16.mxu0 0
    %132 = vmatpush2.bf16.msra.mxu0 0
    %133 = vmatprep.subr.bf16.mxu0 0
    %134 = vmatpush2.bf16.msra.mxu0 0
    %135 = vmatprep.subr.bf16.mxu0 0
    %136 = vmatpush2.bf16.msra.mxu0 0
    %137 = vmatprep.subr.bf16.mxu0 0
    %138 = vmatpush2.bf16.msra.mxu0 0
    %139 = vmatprep.subr.bf16.mxu0 0
    %140 = vmatpush2.bf16.msra.mxu0 0
    %141 = vmatprep.mubr.bf16.mxu0 0
    %142 = vmatmul.mubr.bf16.gmra.mxu0 %v104
    %v143 = vpop.f32.mrf.mxu0
    %v144 = vadd.f32 %v100, %v143
    %v145 = vpop.f32.mrf.mxu0
    %v146 = vpop.f32.mrf.mxu0
    %v147 = vadd.f32 %v100, %v146
    %v148 = vpop.f32.mrf.mxu0
    %149 = vmatprep.mubr.bf16.mxu0 0
    %150 = vmatmul.mubr.bf16.gmra.mxu0 %v107
    %v151 = vpop.f32.mrf.mxu0
    %v152 = vadd.f32 %v100, %v151
    %v153 = vpop.f32.mrf.mxu0
    %v154 = vpop.f32.mrf.mxu0
    %v155 = vpop.f32.mrf.mxu0
    %156 = vdwg.mxu0
    %v157 = vpack.c.bf16 %v147, %v144
    %v158 = vpack.c.bf16 %v152, %v152
    %v160 = vlaneseq
    %v161 = vshrl.u32 %v160, 7
    %v162 = vsub.s32 0, %v161
    %v163 = vrot.slane %v84, %v162
    %v166 = vsel %vm102, %v157, 0
    %v169 = vsel %vm102, %v158, 0
    %171 = vmatprep.subr.bf16.mxu0 0
    %172 = vmatpush1.bf16.msra.mxu0 0
    %173 = vmatprep.subr.bf16.mxu0 0
    %174 = vmatpush1.bf16.msra.mxu0 0
    %175 = vmatprep.subr.bf16.mxu0 0
    %176 = vmatpush1.bf16.msra.mxu0 0
    %177 = vmatprep.subr.bf16.mxu0 0
    %178 = vmatpush1.bf16.msra.mxu0 0
    %179 = vmatprep.subr.bf16.mxu0 0
    %180 = vmatpush1.bf16.msra.mxu0 0
    %181 = vmatprep.subr.bf16.mxu0 0
    %182 = vmatpush1.bf16.msra.mxu0 0
    %183 = vmatprep.subr.bf16.mxu0 0
    %184 = vmatpush1.bf16.msra.mxu0 %v82
    %185 = vmatprep.subr.bf16.mxu0 0
    %186 = vmatpush1.bf16.msra.mxu0 %v81
    %187 = vmatprep.subr.bf16.mxu0 0
    %188 = vmatpush2.bf16.msra.mxu0 0
    %189 = vmatprep.subr.bf16.mxu0 0
    %190 = vmatpush2.bf16.msra.mxu0 0
    %191 = vmatprep.subr.bf16.mxu0 0
    %192 = vmatpush2.bf16.msra.mxu0 0
    %193 = vmatprep.subr.bf16.mxu0 0
    %194 = vmatpush2.bf16.msra.mxu0 0
    %195 = vmatprep.subr.bf16.mxu0 0
    %196 = vmatpush2.bf16.msra.mxu0 0
    %197 = vmatprep.subr.bf16.mxu0 0
    %198 = vmatpush2.bf16.msra.mxu0 0
    %199 = vmatprep.subr.bf16.mxu0 0
    %200 = vmatpush2.bf16.msra.mxu0 0
    %201 = vmatprep.subr.bf16.mxu0 0
    %202 = vmatpush2.bf16.msra.mxu0 0
    %203 = vmatprep.mubr.bf16.mxu0 0
    %204 = vmatmul.mubr.bf16.gmra.mxu0 %v166
    %v205 = vpop.f32.mrf.mxu0
    %v206 = vadd.f32 %v163, %v205
    %v207 = vpop.f32.mrf.mxu0
    %v208 = vpop.f32.mrf.mxu0
    %v209 = vadd.f32 %v163, %v208
    %v210 = vpop.f32.mrf.mxu0
    %211 = vmatprep.mubr.bf16.mxu0 0
    %212 = vmatmul.mubr.bf16.gmra.mxu0 %v169
    %v213 = vpop.f32.mrf.mxu0
    %v214 = vadd.f32 %v163, %v213
    %v215 = vpop.f32.mrf.mxu0
    %v216 = vpop.f32.mrf.mxu0
    %v217 = vpop.f32.mrf.mxu0
    %218 = vdwg.mxu0
    %v219 = vmul.f32 %v206, 1.442695
    %v220 = vpow.pop %v219
    %v221 = vmul.f32 %v209, 1.442695
    %v222 = vpow.pop %v221
    %v223 = vmul.f32 %v214, 1.442695
    %v224 = vpow.pop %v223
    %v225 = vpack.c.bf16 %v89, %v88
    %v226 = vpack.c.bf16 %v90, %v90
    %v228 = vsel %vm102, %v225, 0
    %v231 = vsel %vm102, %v226, 0
    %233 = vmatprep.subr.bf16.mxu0 0
    %234 = vmatpush1.bf16.msra.mxu0 0
    %235 = vmatprep.subr.bf16.mxu0 0
    %236 = vmatpush1.bf16.msra.mxu0 0
    %237 = vmatprep.subr.bf16.mxu0 0
    %238 = vmatpush1.bf16.msra.mxu0 0
    %239 = vmatprep.subr.bf16.mxu0 0
    %240 = vmatpush1.bf16.msra.mxu0 0
    %241 = vmatprep.subr.bf16.mxu0 0
    %242 = vmatpush1.bf16.msra.mxu0 0
    %243 = vmatprep.subr.bf16.mxu0 0
    %244 = vmatpush1.bf16.msra.mxu0 0
    %245 = vmatprep.subr.bf16.mxu0 0
    %246 = vmatpush1.bf16.msra.mxu0 %v76
    %247 = vmatprep.subr.bf16.mxu0 0
    %248 = vmatpush1.bf16.msra.mxu0 %v75
    %249 = vmatprep.subr.bf16.mxu0 0
    %250 = vmatpush2.bf16.msra.mxu0 0
    %251 = vmatprep.subr.bf16.mxu0 0
    %252 = vmatpush2.bf16.msra.mxu0 0
    %253 = vmatprep.subr.bf16.mxu0 0
    %254 = vmatpush2.bf16.msra.mxu0 0
    %255 = vmatprep.subr.bf16.mxu0 0
    %256 = vmatpush2.bf16.msra.mxu0 0
    %257 = vmatprep.subr.bf16.mxu0 0
    %258 = vmatpush2.bf16.msra.mxu0 0
    %259 = vmatprep.subr.bf16.mxu0 0
    %260 = vmatpush2.bf16.msra.mxu0 0
    %261 = vmatprep.subr.bf16.mxu0 0
    %262 = vmatpush2.bf16.msra.mxu0 0
    %263 = vmatprep.subr.bf16.mxu0 0
    %264 = vmatpush2.bf16.msra.mxu0 0
    %265 = vmatprep.mubr.bf16.mxu0 0
    %266 = vmatmul.mubr.bf16.gmra.mxu0 %v228
    %v267 = vpop.f32.mrf.mxu0
    %v268 = vadd.f32 %v100, %v267
    %v269 = vpop.f32.mrf.mxu0
    %v270 = vpop.f32.mrf.mxu0
    %v271 = vadd.f32 %v100, %v270
    %v272 = vpop.f32.mrf.mxu0
    %273 = vmatprep.mubr.bf16.mxu0 0
    %274 = vmatmul.mubr.bf16.gmra.mxu0 %v231
    %v275 = vpop.f32.mrf.mxu0
    %v276 = vadd.f32 %v100, %v275
    %v277 = vpop.f32.mrf.mxu0
    %v278 = vpop.f32.mrf.mxu0
    %v279 = vpop.f32.mrf.mxu0
    %280 = vdwg.mxu0
    %v281 = vpack.c.bf16 %v271, %v268
    %v282 = vpack.c.bf16 %v276, %v276
    %v284 = vsel %vm102, %v281, 0
    %v287 = vsel %vm102, %v282, 0
    %289 = vmatprep.subr.bf16.mxu0 0
    %290 = vmatpush1.bf16.msra.mxu0 0
    %291 = vmatprep.subr.bf16.mxu0 0
    %292 = vmatpush1.bf16.msra.mxu0 0
    %293 = vmatprep.subr.bf16.mxu0 0
    %294 = vmatpush1.bf16.msra.mxu0 0
    %295 = vmatprep.subr.bf16.mxu0 0
    %296 = vmatpush1.bf16.msra.mxu0 0
    %297 = vmatprep.subr.bf16.mxu0 0
    %298 = vmatpush1.bf16.msra.mxu0 0
    %299 = vmatprep.subr.bf16.mxu0 0
    %300 = vmatpush1.bf16.msra.mxu0 0
    %301 = vmatprep.subr.bf16.mxu0 0
    %302 = vmatpush1.bf16.msra.mxu0 %v82
    %303 = vmatprep.subr.bf16.mxu0 0
    %304 = vmatpush1.bf16.msra.mxu0 %v81
    %305 = vmatprep.subr.bf16.mxu0 0
    %306 = vmatpush2.bf16.msra.mxu0 0
    %307 = vmatprep.subr.bf16.mxu0 0
    %308 = vmatpush2.bf16.msra.mxu0 0
    %309 = vmatprep.subr.bf16.mxu0 0
    %310 = vmatpush2.bf16.msra.mxu0 0
    %311 = vmatprep.subr.bf16.mxu0 0
    %312 = vmatpush2.bf16.msra.mxu0 0
    %313 = vmatprep.subr.bf16.mxu0 0
    %314 = vmatpush2.bf16.msra.mxu0 0
    %315 = vmatprep.subr.bf16.mxu0 0
    %316 = vmatpush2.bf16.msra.mxu0 0
    %317 = vmatprep.subr.bf16.mxu0 0
    %318 = vmatpush2.bf16.msra.mxu0 0
    %319 = vmatprep.subr.bf16.mxu0 0
    %320 = vmatpush2.bf16.msra.mxu0 0
    %321 = vmatprep.mubr.bf16.mxu0 0
    %322 = vmatmul.mubr.bf16.gmra.mxu0 %v284
    %v323 = vpop.f32.mrf.mxu0
    %v324 = vadd.f32 %v163, %v323
    %v325 = vpop.f32.mrf.mxu0
    %v326 = vpop.f32.mrf.mxu0
    %v327 = vadd.f32 %v163, %v326
    %v328 = vpop.f32.mrf.mxu0
    %329 = vmatprep.mubr.bf16.mxu0 0
    %330 = vmatmul.mubr.bf16.gmra.mxu0 %v287
    %v331 = vpop.f32.mrf.mxu0
    %v332 = vadd.f32 %v163, %v331
    %v333 = vpop.f32.mrf.mxu0
    %v334 = vpop.f32.mrf.mxu0
    %v335 = vpop.f32.mrf.mxu0
    %336 = vdwg.mxu0
    %v337 = vmul.f32 %v324, 1.442695
    %v338 = vpow.pop %v337
    %v339 = vmul.f32 %v327, 1.442695
    %v340 = vpow.pop %v339
    %v341 = vmul.f32 %v332, 1.442695
    %v342 = vpow.pop %v341
    %v343 = vpack.c.bf16 %v92, %v91
    %v344 = vpack.c.bf16 %v93, %v93
    %v346 = vsel %vm102, %v343, 0
    %v349 = vsel %vm102, %v344, 0
    %351 = vmatprep.subr.bf16.mxu0 0
    %352 = vmatpush1.bf16.msra.mxu0 0
    %353 = vmatprep.subr.bf16.mxu0 0
    %354 = vmatpush1.bf16.msra.mxu0 0
    %355 = vmatprep.subr.bf16.mxu0 0
    %356 = vmatpush1.bf16.msra.mxu0 0
    %357 = vmatprep.subr.bf16.mxu0 0
    %358 = vmatpush1.bf16.msra.mxu0 0
    %359 = vmatprep.subr.bf16.mxu0 0
    %360 = vmatpush1.bf16.msra.mxu0 0
    %361 = vmatprep.subr.bf16.mxu0 0
    %362 = vmatpush1.bf16.msra.mxu0 0
    %363 = vmatprep.subr.bf16.mxu0 0
    %364 = vmatpush1.bf16.msra.mxu0 %v76
    %365 = vmatprep.subr.bf16.mxu0 0
    %366 = vmatpush1.bf16.msra.mxu0 %v75
    %367 = vmatprep.subr.bf16.mxu0 0
    %368 = vmatpush2.bf16.msra.mxu0 0
    %369 = vmatprep.subr.bf16.mxu0 0
    %370 = vmatpush2.bf16.msra.mxu0 0
    %371 = vmatprep.subr.bf16.mxu0 0
    %372 = vmatpush2.bf16.msra.mxu0 0
    %373 = vmatprep.subr.bf16.mxu0 0
    %374 = vmatpush2.bf16.msra.mxu0 0
    %375 = vmatprep.subr.bf16.mxu0 0
    %376 = vmatpush2.bf16.msra.mxu0 0
    %377 = vmatprep.subr.bf16.mxu0 0
    %378 = vmatpush2.bf16.msra.mxu0 0
    %379 = vmatprep.subr.bf16.mxu0 0
    %380 = vmatpush2.bf16.msra.mxu0 0
    %381 = vmatprep.subr.bf16.mxu0 0
    %382 = vmatpush2.bf16.msra.mxu0 0
    %383 = vmatprep.mubr.bf16.mxu0 0
    %384 = vmatmul.mubr.bf16.gmra.mxu0 %v346
    %v385 = vpop.f32.mrf.mxu0
    %v386 = vadd.f32 %v100, %v385
    %v387 = vpop.f32.mrf.mxu0
    %v388 = vpop.f32.mrf.mxu0
    %v389 = vadd.f32 %v100, %v388
    %v390 = vpop.f32.mrf.mxu0
    %391 = vmatprep.mubr.bf16.mxu0 0
    %392 = vmatmul.mubr.bf16.gmra.mxu0 %v349
    %v393 = vpop.f32.mrf.mxu0
    %v394 = vadd.f32 %v100, %v393
    %v395 = vpop.f32.mrf.mxu0
    %v396 = vpop.f32.mrf.mxu0
    %v397 = vpop.f32.mrf.mxu0
    %398 = vdwg.mxu0
    %v399 = vpack.c.bf16 %v389, %v386
    %v400 = vpack.c.bf16 %v394, %v394
    %v402 = vsel %vm102, %v399, 0
    %v405 = vsel %vm102, %v400, 0
    %407 = vmatprep.subr.bf16.mxu0 0
    %408 = vmatpush1.bf16.msra.mxu0 0
    %409 = vmatprep.subr.bf16.mxu0 0
    %410 = vmatpush1.bf16.msra.mxu0 0
    %411 = vmatprep.subr.bf16.mxu0 0
    %412 = vmatpush1.bf16.msra.mxu0 0
    %413 = vmatprep.subr.bf16.mxu0 0
    %414 = vmatpush1.bf16.msra.mxu0 0
    %415 = vmatprep.subr.bf16.mxu0 0
    %416 = vmatpush1.bf16.msra.mxu0 0
    %417 = vmatprep.subr.bf16.mxu0 0
    %418 = vmatpush1.bf16.msra.mxu0 0
    %419 = vmatprep.subr.bf16.mxu0 0
    %420 = vmatpush1.bf16.msra.mxu0 %v82
    %421 = vmatprep.subr.bf16.mxu0 0
    %422 = vmatpush1.bf16.msra.mxu0 %v81
    %423 = vmatprep.subr.bf16.mxu0 0
    %424 = vmatpush2.bf16.msra.mxu0 0
    %425 = vmatprep.subr.bf16.mxu0 0
    %426 = vmatpush2.bf16.msra.mxu0 0
    %427 = vmatprep.subr.bf16.mxu0 0
    %428 = vmatpush2.bf16.msra.mxu0 0
    %429 = vmatprep.subr.bf16.mxu0 0
    %430 = vmatpush2.bf16.msra.mxu0 0
    %431 = vmatprep.subr.bf16.mxu0 0
    %432 = vmatpush2.bf16.msra.mxu0 0
    %433 = vmatprep.subr.bf16.mxu0 0
    %434 = vmatpush2.bf16.msra.mxu0 0
    %435 = vmatprep.subr.bf16.mxu0 0
    %436 = vmatpush2.bf16.msra.mxu0 0
    %437 = vmatprep.subr.bf16.mxu0 0
    %438 = vmatpush2.bf16.msra.mxu0 0
    %439 = vmatprep.mubr.bf16.mxu0 0
    %440 = vmatmul.mubr.bf16.gmra.mxu0 %v402
    %v441 = vpop.f32.mrf.mxu0
    %v442 = vadd.f32 %v163, %v441
    %v443 = vpop.f32.mrf.mxu0
    %v444 = vpop.f32.mrf.mxu0
    %v445 = vadd.f32 %v163, %v444
    %v446 = vpop.f32.mrf.mxu0
    %447 = vmatprep.mubr.bf16.mxu0 0
    %448 = vmatmul.mubr.bf16.gmra.mxu0 %v405
    %v449 = vpop.f32.mrf.mxu0
    %v450 = vadd.f32 %v163, %v449
    %v451 = vpop.f32.mrf.mxu0
    %v452 = vpop.f32.mrf.mxu0
    %v453 = vpop.f32.mrf.mxu0
    %454 = vdwg.mxu0
    %v455 = vmul.f32 %v442, 1.442695
    %v456 = vpow.pop %v455
    %v457 = vmul.f32 %v445, 1.442695
    %v458 = vpow.pop %v457
    %v459 = vmul.f32 %v450, 1.442695
    %v460 = vpow.pop %v459
    %v461 = vmax.f32 %v220, %v338
    %v462 = vmax.f32 %v222, %v340
    %v463 = vmax.f32 %v224, %v342
    %v464 = vmax.f32 %v461, %v456
    %v465 = vmax.f32 %v462, %v458
    %v466 = vmax.f32 %v463, %v460
    %v467 = vsub.f32 %v220, %v464
    %v468 = vsub.f32 %v222, %v465
    %v469 = vsub.f32 %v224, %v466
    %v470 = vmul.f32 %v467, 1.442695
    %v471 = vpow.pop %v470
    %v472 = vmul.f32 %v468, 1.442695
    %v473 = vpow.pop %v472
    %v474 = vmul.f32 %v469, 1.442695
    %v475 = vpow.pop %v474
    %v476 = vsub.f32 %v338, %v464
    %v477 = vsub.f32 %v340, %v465
    %v478 = vsub.f32 %v342, %v466
    %v479 = vmul.f32 %v476, 1.442695
    %v480 = vpow.pop %v479
    %v481 = vmul.f32 %v477, 1.442695
    %v482 = vpow.pop %v481
    %v483 = vmul.f32 %v478, 1.442695
    %v484 = vpow.pop %v483
    %v485 = vsub.f32 %v456, %v464
    %v486 = vsub.f32 %v458, %v465
    %v487 = vsub.f32 %v460, %v466
    %v488 = vmul.f32 %v485, 1.442695
    %v489 = vpow.pop %v488
    %v490 = vmul.f32 %v486, 1.442695
    %v491 = vpow.pop %v490
    %v492 = vmul.f32 %v487, 1.442695
    %v493 = vpow.pop %v492
    %v494 = vadd.f32 %v471, %v480
    %v495 = vadd.f32 %v473, %v482
    %v496 = vadd.f32 %v475, %v484
    %v497 = vadd.f32 %v494, %v489
    %v498 = vadd.f32 %v495, %v491
    %v499 = vadd.f32 %v496, %v493
    %501 = vset.pattern.permute.xlu0 0
    %502 = vperm.xlu0 %501, %v471
    %v503 = vpop.permute.xlu0 %502
    %506 = vset.pattern.permute.xlu0 0
    %507 = vperm.xlu0 %506, %v473
    %v508 = vpop.permute.xlu0 %507
    %511 = vset.pattern.permute.xlu0 0
    %512 = vperm.xlu0 %511, %v475
    %v513 = vpop.permute.xlu0 %512
    %v515 = vmul.f32 %v503, %v85
    %v516 = vmul.f32 %v508, %v86
    %v517 = vmul.f32 %v513, %v87
    %519 = vset.pattern.permute.xlu0 0
    %520 = vperm.xlu0 %519, %v480
    %v521 = vpop.permute.xlu0 %520
    %524 = vset.pattern.permute.xlu0 0
    %525 = vperm.xlu0 %524, %v482
    %v526 = vpop.permute.xlu0 %525
    %529 = vset.pattern.permute.xlu0 0
    %530 = vperm.xlu0 %529, %v484
    %v531 = vpop.permute.xlu0 %530
    %v533 = vmul.f32 %v521, %v88
    %v534 = vmul.f32 %v526, %v89
    %v535 = vmul.f32 %v531, %v90
    %v536 = vadd.f32 %v515, %v533
    %v537 = vadd.f32 %v516, %v534
    %v538 = vadd.f32 %v517, %v535
    %540 = vset.pattern.permute.xlu0 0
    %541 = vperm.xlu0 %540, %v489
    %v542 = vpop.permute.xlu0 %541
    %545 = vset.pattern.permute.xlu0 0
    %546 = vperm.xlu0 %545, %v491
    %v547 = vpop.permute.xlu0 %546
    %550 = vset.pattern.permute.xlu0 0
    %551 = vperm.xlu0 %550, %v493
    %v552 = vpop.permute.xlu0 %551
    %v554 = vmul.f32 %v542, %v91
    %v555 = vmul.f32 %v547, %v92
    %v556 = vmul.f32 %v552, %v93
    %v557 = vadd.f32 %v536, %v554
    %v558 = vadd.f32 %v537, %v555
    %v559 = vadd.f32 %v538, %v556
    %561 = vset.pattern.permute.xlu0 0
    %562 = vperm.xlu0 %561, %v497
    %v563 = vpop.permute.xlu0 %562
    %566 = vset.pattern.permute.xlu0 0
    %567 = vperm.xlu0 %566, %v498
    %v568 = vpop.permute.xlu0 %567
    %571 = vset.pattern.permute.xlu0 0
    %572 = vperm.xlu0 %571, %v499
    %v573 = vpop.permute.xlu0 %572
    %v575 = vrcp.pop %v563
    %v576 = vmul.f32 %v557, %v575
    %v577 = vrcp.pop %v568
    %v578 = vmul.f32 %v558, %v577
    %v579 = vrcp.pop %v573
    %v580 = vmul.f32 %v559, %v579
    %581 = vst.msk [vmem:[#allocation9] sm:$0xff] %vm102, %v576
    %582 = vst.msk [vmem:[#allocation9 + $0x8] sm:$0xff] %vm102, %v578
    %vm583 = vcmask 258048
    %584 = vst.msk [vmem:[#allocation9 + $0x10] sm:$0x1f] %vm583, %v580
    // Predicated region
    $region42: #{tpu_custom_call.1} parent=1 // pred_check
      _
    $region43: #{tpu_custom_call.1} parent=1 // pred_check_branch
      %586 = sbr.rel (0) target = $region45
    $region44: #{tpu_custom_call.1} parent=1 // pred_region
      %s588 = ssub.s32 384, 384
      %589 = vsyncadd [#allocation5], %s588
      %s590 = sshll.u32 [#allocation9], 4
      %s591 = int_to_ptr.vmem [resolvable:$true] %s590
      %596 = dma.vmem_to_hbm [thread:$0]  %s591, 384, %s7, [#allocation5], 128, 128, 8
    $region45: #{tpu_custom_call.1} parent=1 // pred_fallthru
      _
    // Predicated region
    $region46: #{tpu_custom_call.1} parent=1 // pred_check
      _
    $region47: #{tpu_custom_call.1} parent=1 // pred_check_branch
      %598 = sbr.rel (0) target = $region49
    $region48: #{tpu_custom_call.1} parent=1 // pred_region
      %599 = dma.done [#allocation5], 384
    $region49: #{tpu_custom_call.1} parent=1 // pred_fallthru
      _
    %600 = vsyncpa [#allocation4], 1
    %601 = vsyncpa [#allocation7], 1
    %602 = vsyncpa [#allocation5], 1

</llo_original>
